<compile_context>
chip_gen: v6e
topology: v6e:2x2x1
jax: 0.10.0
libtpu: 0.0.40
codegen_flags: <defaults>
</compile_context>

<pallas_src>
import math

import jax
import jax.numpy as jnp
from jax.experimental import pallas as pl
from jax.experimental.pallas import tpu as pltpu


def _attention_kernel(x_ref, bias_ref, wbd_ref, b1t_ref, w2sel_ref,
                      srep_ref, ssum_ref, out_ref):
    # x_ref:     (TB, S*D)   batch rows of X, lane-dense (f32 or bf16)
    # bias_ref:  (TB, S)     additive mask bias (0 keep / -1e30 drop), f32
    # wbd_ref:   (S*D, S*H)  block-diagonal W1^T = kron(I_S, W1^T)
    # b1t_ref:   (1, S*H)    b1 tiled S times, f32
    # w2sel_ref: (S*H, S)    kron(I_S, w2^T): per-position logit selector, f32
    # srep_ref:  (S, S*D)    kron(I_S, 1_{1xD}): score -> lane-repeat, f32
    # ssum_ref:  (S*D, D)    kron(1_{Sx1}, I_D): segment-sum over seq, f32
    # out_ref:   (TB, D)     pooled output, f32
    x = x_ref[...]

    # ---- Linear1 + tanh: one lane-dense MXU matmul (K = N = S*D) ----------
    h = jnp.tanh(
        jnp.dot(x, wbd_ref[...], preferred_element_type=jnp.float32)
        + b1t_ref[...]
    )                                                        # (TB, S*H) f32

    # ---- Linear2 (out_features = 1) as a selector matmul + mask bias ------
    # b2 is omitted: softmax(logits + const) == softmax(logits).
    logits = (jnp.dot(h, w2sel_ref[...], preferred_element_type=jnp.float32)
              + bias_ref[...])                               # (TB, S)

    # ---- softmax over the sequence axis (lanes) ----------------------------
    m = jnp.max(logits, axis=-1, keepdims=True)              # (TB, 1)
    e = jnp.exp(logits - m)                                  # (TB, S)
    score = e / jnp.sum(e, axis=-1, keepdims=True)           # (TB, S)

    # ---- weighted sum over the sequence, staying lane-dense ---------------
    # score_rep[b, s*D+d] = score[b, s]  (tiny MXU matmul, no relayout)
    score_rep = jnp.dot(score, srep_ref[...],
                        preferred_element_type=jnp.float32)  # (TB, S*D)
    weighted = x.astype(jnp.float32) * score_rep             # (TB, S*D) f32
    # out[b, d] = sum_s weighted[b, s*D+d]  (selector matmul, K = S*D full)
    out_ref[...] = jnp.dot(weighted, ssum_ref[...],
                           preferred_element_type=jnp.float32
                           ).astype(out_ref.dtype)           # (TB, D)


def _round_up(a, m):
    return (a + m - 1) // m * m


def _choose_batch_tile(B, S, D, x_itemsize, vmem_budget_bytes=12 * 1024 * 1024):
    """Pick the batch tile TB (multiple of 8), number of tiles, and padded B.

    TB is made as large as a ~12 MiB double-buffered VMEM budget allows (well
    under the 16/32 MiB scoped defaults of v5e/v6e/v7x, and under v7x's 64 MiB
    physical VMEM), so per-grid-step overhead is amortised; for large B we keep
    >= 2 tiles so the 'parallel' batch axis can shard across v7x's two TCs.
    """
    align = 8                               # sublane granularity
    if B <= align:
        return align, 1, align              # minimum tile; pad B up to 8 rows
    # per-batch-row VMEM bytes (double-buffered), with lane padding to 128
    x_row = _round_up(S * D, 128) * x_itemsize
    bias_row = _round_up(S, 128) * 4
    out_row = _round_up(D, 128) * 4
    per_row = 2 * (x_row + bias_row + out_row)
    cap = max(align, (vmem_budget_bytes // per_row) // align * align)
    full = _round_up(B, align)
    tb = min(cap, full)
    if tb == full and full >= 2 * align:    # single tile would cover all of B
        tb = _round_up(-(-B // 2), align)   # -> split into ~2 tiles (megacore)
    n_tiles = -(-B // tb)
    tb = _round_up(-(-B // n_tiles), align)  # rebalance to minimise padding
    n_tiles = -(-B // tb)
    return tb, n_tiles, n_tiles * tb


def attention_forward(x, mask, w1, b1, w2, b2, *, x_dtype=jnp.float32):
    """Pallas TPU forward of the MSN Attention module.

    x: (B, S, D) f32, mask: (B, S) bool (True = keep).
    w1: (H, D), b1: (H,), w2: (1, H), b2: (1,) (PyTorch nn.Linear layout).
    Returns (B, D) f32.  b2 is accepted for API parity but unused in-kernel
    (softmax is shift-invariant in the logits).
    x_dtype=jnp.bfloat16 halves the dominant HBM stream (gate on tolerance).
    """
    B, S, D = x.shape
    H = w1.shape[0]
    del b2  # shift-invariant under softmax; numerically identical to drop it

    x_itemsize = jnp.dtype(x_dtype).itemsize
    TB, n_tiles, B_pad = _choose_batch_tile(B, S, D, x_itemsize)

    # x rows presented lane-dense as (B, S*D): a free row-major view.
    x2 = x.reshape(B, S * D).astype(x_dtype)
    # Additive mask bias (0 keep / -1e30 drop).  Finite, so fully-masked rows
    # give a uniform softmax instead of NaN (the PyTorch module would NaN).
    bias = jnp.where(mask, 0.0, -1e30).astype(jnp.float32)
    if B_pad != B:
        pad = B_pad - B
        x2 = jnp.pad(x2, ((0, pad), (0, 0)))
        bias = jnp.pad(bias, ((0, pad), (0, 0)))   # bias 0 => finite softmax

    f32 = jnp.float32
    w1t = jnp.transpose(w1).astype(f32)                               # (D, H)
    eye_s = jnp.eye(S, dtype=f32)
    # Block-diagonal W1^T: keeps x lane-dense and fills the MXU contraction.
    wbd = jnp.kron(eye_s, w1t).astype(x_dtype)                        # (S*D, S*H)
    b1t = jnp.tile(b1.astype(f32), (S,)).reshape(1, S * H)            # (1, S*H)
    w2sel = jnp.kron(eye_s, w2.reshape(H, 1).astype(f32))             # (S*H, S)
    srep = jnp.kron(eye_s, jnp.ones((1, D), f32))                     # (S, S*D)
    ssum = jnp.kron(jnp.ones((S, 1), f32), jnp.eye(D, dtype=f32))     # (S*D, D)

    out = pl.pallas_call(
        _attention_kernel,
        out_shape=jax.ShapeDtypeStruct((B_pad, D), jnp.float32),
        grid_spec=pltpu.PrefetchScalarGridSpec(
            num_scalar_prefetch=0,
            grid=(n_tiles,),
            in_specs=[
                pl.BlockSpec((TB, S * D), lambda b: (b, 0)),        # x (streamed)
                pl.BlockSpec((TB, S), lambda b: (b, 0)),            # mask bias
                pl.BlockSpec((S * D, S * H), lambda b: (0, 0)),     # Wbd (resident)
                pl.BlockSpec((1, S * H), lambda b: (0, 0)),         # b1 tiled
                pl.BlockSpec((S * H, S), lambda b: (0, 0)),         # W2 selector
                pl.BlockSpec((S, S * D), lambda b: (0, 0)),         # repeat selector
                pl.BlockSpec((S * D, D), lambda b: (0, 0)),         # sum selector
            ],
            out_specs=pl.BlockSpec((TB, D), lambda b: (b, 0)),
        ),
        compiler_params=pltpu.CompilerParams(
            dimension_semantics=("parallel",),      # shard batch tiles across TCs
            vmem_limit_bytes=32 * 1024 * 1024,      # headroom over the 16 MiB v5e default
        ),
    )(x2, bias, wbd, b1t, w2sel, srep, ssum)
    return out[:B]


def _reference(x, mask, w1, b1, w2, b2):
    # Pure-JAX reference mirroring the PyTorch forward (full f32 precision).
    hp = jax.lax.Precision.HIGHEST
    m = jnp.tanh(jnp.einsum("bsd,hd->bsh", x, w1, precision=hp) + b1)
    m = jnp.einsum("bsh,oh->bso", m, w2, precision=hp) + b2           # (B, S, 1)
    m = jnp.where(mask[..., None], m, -jnp.inf)
    score = jax.nn.softmax(m, axis=1)
    return jnp.sum(score * x, axis=1)


if __name__ == "__main__":
    key = jax.random.PRNGKey(0)
    B, S, D, H = 2, 8, 32, 32   # batch, seq, input_size, hidden_size

    k_x, k_w1, k_w2, k_b1, k_b2, k_x2, k_len = jax.random.split(key, 7)

    x = jax.random.normal(k_x, (B, S, D), dtype=jnp.float32)

    # xavier_normal_ init for the two Linear weights, default uniform for biases
    std1 = math.sqrt(2.0 / (D + H))
    w1 = std1 * jax.random.normal(k_w1, (H, D), dtype=jnp.float32)
    std2 = math.sqrt(2.0 / (H + 1))
    w2 = std2 * jax.random.normal(k_w2, (1, H), dtype=jnp.float32)
    b1 = jax.random.uniform(k_b1, (H,), minval=-1.0 / math.sqrt(D),
                            maxval=1.0 / math.sqrt(D), dtype=jnp.float32)
    b2 = jax.random.uniform(k_b2, (1,), minval=-1.0 / math.sqrt(H),
                            maxval=1.0 / math.sqrt(H), dtype=jnp.float32)

    # deterministic mask: first `len[b]` positions are valid (at least one valid)
    lengths = jnp.array([S, S // 2], dtype=jnp.int32)
    mask = jnp.arange(S)[None, :] < lengths[:, None]          # (B, S) bool

    # f32 path (exact semantics)
    out = jax.block_until_ready(attention_forward(x, mask, w1, b1, w2, b2))
    ref = _reference(x, mask, w1, b1, w2, b2)
    assert out.shape == (B, D)
    assert jnp.allclose(out, ref, atol=1e-4, rtol=1e-4), "f32 mismatch vs reference"

    # bf16 x-stream fast path (halves dominant HBM traffic; looser tolerance)
    out_bf16 = jax.block_until_ready(
        attention_forward(x, mask, w1, b1, w2, b2, x_dtype=jnp.bfloat16))
    assert jnp.allclose(out_bf16, ref, atol=1e-1, rtol=1e-1), "bf16 mismatch vs reference"

    # moderate batch: exercises adaptive tiling, 2-tile split and batch padding
    B2 = 300
    x_big = jax.random.normal(k_x2, (B2, S, D), dtype=jnp.float32)
    len_big = jax.random.randint(k_len, (B2,), 1, S + 1)
    mask_big = jnp.arange(S)[None, :] < len_big[:, None]
    out_big = jax.block_until_ready(
        attention_forward(x_big, mask_big, w1, b1, w2, b2))
    ref_big = _reference(x_big, mask_big, w1, b1, w2, b2)
    assert jnp.allclose(out_big, ref_big, atol=1e-4, rtol=1e-4), "multi-tile mismatch"

    print("KERNEL_OK")
</pallas_src>

<mosaic_0001>
module attributes {stable_mosaic.version = 11 : i64} {
  func.func @_attention_kernel(%arg0: i32, %arg1: memref<8x256xf32, #tpu.memory_space<vmem>>, %arg2: memref<8x8xf32, #tpu.memory_space<vmem>>, %arg3: memref<256x256xf32, #tpu.memory_space<vmem>>, %arg4: memref<1x256xf32, #tpu.memory_space<vmem>>, %arg5: memref<256x8xf32, #tpu.memory_space<vmem>>, %arg6: memref<8x256xf32, #tpu.memory_space<vmem>>, %arg7: memref<256x32xf32, #tpu.memory_space<vmem>>, %arg8: memref<8x32xf32, #tpu.memory_space<vmem>>) attributes {dimension_semantics = [#tpu.dimension_semantics<parallel>], iteration_bounds = array<i64: 1>, scalar_prefetch = 0 : i64, scratch_operands = 0 : i64, tpu.core_type = #tpu.core_type<tc>, window_params = [{transform_indices = @transform_0, window_bounds = array<i64: 8, 256>}, {transform_indices = @transform_1, window_bounds = array<i64: 8, 8>}, {pipeline_mode = #tpu.pipeline_mode<synchronous>, transform_indices = @transform_2, window_bounds = array<i64: 256, 256>}, {pipeline_mode = #tpu.pipeline_mode<synchronous>, transform_indices = @transform_3, window_bounds = array<i64: 1, 256>}, {pipeline_mode = #tpu.pipeline_mode<synchronous>, transform_indices = @transform_4, window_bounds = array<i64: 256, 8>}, {pipeline_mode = #tpu.pipeline_mode<synchronous>, transform_indices = @transform_5, window_bounds = array<i64: 8, 256>}, {pipeline_mode = #tpu.pipeline_mode<synchronous>, transform_indices = @transform_6, window_bounds = array<i64: 256, 32>}, {transform_indices = @transform_7, window_bounds = array<i64: 8, 32>}]} {
    %c0 = arith.constant 0 : index
    %c0_0 = arith.constant 0 : index
    %0 = vector.load %arg1[%c0, %c0_0] : memref<8x256xf32, #tpu.memory_space<vmem>>, vector<8x256xf32>
    %c0_1 = arith.constant 0 : index
    %c0_2 = arith.constant 0 : index
    %1 = vector.load %arg3[%c0_1, %c0_2] : memref<256x256xf32, #tpu.memory_space<vmem>>, vector<256x256xf32>
    %cst = arith.constant dense<0.000000e+00> : vector<8x256xf32>
    %2 = tpu.matmul %0, %1, %cst {dimension_numbers = #tpu.dot_dimension_numbers<[1], [0], [0], [1], [0, 0, 1, 1], [], []>} : vector<8x256xf32>, vector<256x256xf32>, vector<8x256xf32> -> vector<8x256xf32>
    %c0_3 = arith.constant 0 : index
    %c0_4 = arith.constant 0 : index
    %3 = vector.load %arg4[%c0_3, %c0_4] : memref<1x256xf32, #tpu.memory_space<vmem>>, vector<1x256xf32>
    %4 = vector.broadcast %3 : vector<1x256xf32> to vector<8x256xf32>
    %5 = arith.addf %2, %4 : vector<8x256xf32>
    %6 = math.tanh %5 : vector<8x256xf32>
    %c0_5 = arith.constant 0 : index
    %c0_6 = arith.constant 0 : index
    %7 = vector.load %arg5[%c0_5, %c0_6] : memref<256x8xf32, #tpu.memory_space<vmem>>, vector<256x8xf32>
    %cst_7 = arith.constant dense<0.000000e+00> : vector<8x8xf32>
    %8 = tpu.matmul %6, %7, %cst_7 {dimension_numbers = #tpu.dot_dimension_numbers<[1], [0], [0], [1], [0, 0, 1, 1], [], []>} : vector<8x256xf32>, vector<256x8xf32>, vector<8x8xf32> -> vector<8x8xf32>
    %c0_8 = arith.constant 0 : index
    %c0_9 = arith.constant 0 : index
    %9 = vector.load %arg2[%c0_8, %c0_9] : memref<8x8xf32, #tpu.memory_space<vmem>>, vector<8x8xf32>
    %10 = arith.addf %8, %9 : vector<8x8xf32>
    %cst_10 = arith.constant dense<0xFF800000> : vector<8xf32>
    %11 = vector.multi_reduction <maximumf>, %10, %cst_10 [1] : vector<8x8xf32> to vector<8xf32>
    %12 = vector.shape_cast %11 : vector<8xf32> to vector<8x1xf32>
    %13 = vector.broadcast %12 : vector<8x1xf32> to vector<8x8xf32>
    %14 = arith.subf %10, %13 : vector<8x8xf32>
    %15 = math.exp %14 : vector<8x8xf32>
    %cst_11 = arith.constant dense<0.000000e+00> : vector<8xf32>
    %16 = vector.multi_reduction <add>, %15, %cst_11 [1] : vector<8x8xf32> to vector<8xf32>
    %17 = vector.shape_cast %16 : vector<8xf32> to vector<8x1xf32>
    %18 = vector.broadcast %17 : vector<8x1xf32> to vector<8x8xf32>
    %19 = arith.divf %15, %18 : vector<8x8xf32>
    %c0_12 = arith.constant 0 : index
    %c0_13 = arith.constant 0 : index
    %20 = vector.load %arg6[%c0_12, %c0_13] : memref<8x256xf32, #tpu.memory_space<vmem>>, vector<8x256xf32>
    %cst_14 = arith.constant dense<0.000000e+00> : vector<8x256xf32>
    %21 = tpu.matmul %19, %20, %cst_14 {dimension_numbers = #tpu.dot_dimension_numbers<[1], [0], [0], [1], [0, 0, 1, 1], [], []>} : vector<8x8xf32>, vector<8x256xf32>, vector<8x256xf32> -> vector<8x256xf32>
    %22 = arith.mulf %0, %21 : vector<8x256xf32>
    %c0_15 = arith.constant 0 : index
    %c0_16 = arith.constant 0 : index
    %23 = vector.load %arg7[%c0_15, %c0_16] : memref<256x32xf32, #tpu.memory_space<vmem>>, vector<256x32xf32>
    %cst_17 = arith.constant dense<0.000000e+00> : vector<8x32xf32>
    %24 = tpu.matmul %22, %23, %cst_17 {dimension_numbers = #tpu.dot_dimension_numbers<[1], [0], [0], [1], [0, 0, 1, 1], [], []>} : vector<8x256xf32>, vector<256x32xf32>, vector<8x32xf32> -> vector<8x32xf32>
    %c0_18 = arith.constant 0 : index
    %c0_19 = arith.constant 0 : index
    %25 = vector.load %arg8[%c0_18, %c0_19] : memref<8x32xf32, #tpu.memory_space<vmem>>, vector<8x32xf32>
    tpu.vector_store %arg8[%c0_18, %c0_19], %24 {strides = array<i32>} : memref<8x32xf32, #tpu.memory_space<vmem>>, vector<8x32xf32>,
    return
  }
  func.func @transform_0(%arg0: i32) -> (i32, i32) {
    %c0_i32 = arith.constant 0 : i32
    %c0_i32_0 = arith.constant 0 : i32
    return %arg0, %c0_i32 : i32, i32
  }
  func.func @transform_1(%arg0: i32) -> (i32, i32) {
    %c0_i32 = arith.constant 0 : i32
    %c0_i32_0 = arith.constant 0 : i32
    return %arg0, %c0_i32 : i32, i32
  }
  func.func @transform_2(%arg0: i32) -> (i32, i32) {
    %c0_i32 = arith.constant 0 : i32
    %c0_i32_0 = arith.constant 0 : i32
    %c0_i32_1 = arith.constant 0 : i32
    return %c0_i32, %c0_i32_0 : i32, i32
  }
  func.func @transform_3(%arg0: i32) -> (i32, i32) {
    %c0_i32 = arith.constant 0 : i32
    %c0_i32_0 = arith.constant 0 : i32
    %c0_i32_1 = arith.constant 0 : i32
    return %c0_i32, %c0_i32_0 : i32, i32
  }
  func.func @transform_4(%arg0: i32) -> (i32, i32) {
    %c0_i32 = arith.constant 0 : i32
    %c0_i32_0 = arith.constant 0 : i32
    %c0_i32_1 = arith.constant 0 : i32
    return %c0_i32, %c0_i32_0 : i32, i32
  }
  func.func @transform_5(%arg0: i32) -> (i32, i32) {
    %c0_i32 = arith.constant 0 : i32
    %c0_i32_0 = arith.constant 0 : i32
    %c0_i32_1 = arith.constant 0 : i32
    return %c0_i32, %c0_i32_0 : i32, i32
  }
  func.func @transform_6(%arg0: i32) -> (i32, i32) {
    %c0_i32 = arith.constant 0 : i32
    %c0_i32_0 = arith.constant 0 : i32
    %c0_i32_1 = arith.constant 0 : i32
    return %c0_i32, %c0_i32_0 : i32, i32
  }
  func.func @transform_7(%arg0: i32) -> (i32, i32) {
    %c0_i32 = arith.constant 0 : i32
    %c0_i32_0 = arith.constant 0 : i32
    return %arg0, %c0_i32 : i32, i32
  }
}

</mosaic_0001>

<llo_original>
// kernel: tpu_custom_call.1
$region0: #{tpu_custom_call.1}
  #allocation0 [shape = 'u32[]', space=smem, size = 0x4, offset = 0x4, fixed_abs, tag = 'smem constant byte address 0x4 - core index']
  #allocation1 [shape = 'u32[144,128]{1,0:T(1,128)}', space=vmem, size = 0x12000, scoped, tag = 'internal scratch']
  %s0 = inlined_call_operand.vmem [shape: f32[8,256], index: 0, kind: input, shape index: {}]
  %s1 = inlined_call_operand.hbm [shape: f32[8,8], index: 1, kind: input, shape index: {}]
  %s2 = inlined_call_operand.vmem [shape: f32[256,256], index: 2, kind: input, shape index: {}]
  %s3 = inlined_call_operand.vmem [shape: f32[1,256], index: 3, kind: input, shape index: {}]
  %s4 = inlined_call_operand.vmem [shape: f32[256,8], index: 4, kind: input, shape index: {}]
  %s5 = inlined_call_operand.hbm [shape: f32[8,256], index: 5, kind: input, shape index: {}]
  %s6 = inlined_call_operand.vmem [shape: f32[256,32], index: 6, kind: input, shape index: {}]
  %s7 = inlined_call_operand.hbm [shape: f32[8,32], index: 7, kind: output, shape index: {}]
  %s8 = sld [smem:[#allocation0]]
  $region46: #{tpu_custom_call.1} parent=0
    _
  %s10 = ssub.s32 1, %s8
  %s11 = scalar_select 0, %s10, %s8
  $region1: #{tpu_custom_call.1} parent=0
    #allocation2 [shape = 'u8[4096]{0}', space=vmem, size = 0x1000, scoped, tag = 'input window, operand 1, single buffered']
    #allocation3 [shape = 's32[1]{0}', space=sflag, size = 0x4, scoped, tag = 'scoped memory for tpu_custom_call.1']
    #allocation4 [shape = 's32[1]{0}', space=sflag, size = 0x4, scoped, tag = 'scoped memory for tpu_custom_call.1']
    #allocation5 [shape = 'u8[8192]{0}', space=vmem, size = 0x2000, scoped, tag = 'input window, operand 5, single buffered']
    #allocation6 [shape = 's32[1]{0}', space=sflag, size = 0x4, scoped, tag = 'scoped memory for tpu_custom_call.1']
    #allocation7 [shape = 'u8[4096]{0}', space=vmem, size = 0x1000, scoped, tag = 'output window, operand 0, single buffered']
    %12 = vsyncpa [#allocation3], 0
    %13 = vsyncpa [#allocation6], 0
    %14 = vsyncpa [#allocation4], 0
    // Predicated region
    $region2: #{tpu_custom_call.1} parent=1 // pred_check
      _
    $region3: #{tpu_custom_call.1} parent=1 // pred_check_branch
      %16 = sbr.rel (0) target = $region5
    $region4: #{tpu_custom_call.1} parent=1 // pred_region
      _
    $region5: #{tpu_custom_call.1} parent=1 // pred_fallthru
      _
    // Predicated region
    $region6: #{tpu_custom_call.1} parent=1 // pred_check
      _
    $region7: #{tpu_custom_call.1} parent=1 // pred_check_branch
      %18 = sbr.rel (0) target = $region9
    $region8: #{tpu_custom_call.1} parent=1 // pred_region
      %s20 = ssub.s32 128, 128
      %21 = vsyncadd [#allocation3], %s20
      %s23 = sshll.u32 [#allocation2], 4
      %s24 = int_to_ptr.vmem [resolvable:$true] %s23
      %26 = dma.hbm_to_vmem [thread:$0]  %s1, 128, %s24, [#allocation3]
    $region9: #{tpu_custom_call.1} parent=1 // pred_fallthru
      _
    // Predicated region
    $region10: #{tpu_custom_call.1} parent=1 // pred_check
      _
    $region11: #{tpu_custom_call.1} parent=1 // pred_check_branch
      %28 = sbr.rel (0) target = $region13
    $region12: #{tpu_custom_call.1} parent=1 // pred_region
      _
    $region13: #{tpu_custom_call.1} parent=1 // pred_fallthru
      _
    // Predicated region
    $region14: #{tpu_custom_call.1} parent=1 // pred_check
      _
    $region15: #{tpu_custom_call.1} parent=1 // pred_check_branch
      %30 = sbr.rel (0) target = $region17
    $region16: #{tpu_custom_call.1} parent=1 // pred_region
      _
    $region17: #{tpu_custom_call.1} parent=1 // pred_fallthru
      _
    // Predicated region
    $region18: #{tpu_custom_call.1} parent=1 // pred_check
      _
    $region19: #{tpu_custom_call.1} parent=1 // pred_check_branch
      %32 = sbr.rel (0) target = $region21
    $region20: #{tpu_custom_call.1} parent=1 // pred_region
      _
    $region21: #{tpu_custom_call.1} parent=1 // pred_fallthru
      _
    // Predicated region
    $region22: #{tpu_custom_call.1} parent=1 // pred_check
      _
    $region23: #{tpu_custom_call.1} parent=1 // pred_check_branch
      %34 = sbr.rel (0) target = $region25
    $region24: #{tpu_custom_call.1} parent=1 // pred_region
      %s36 = ssub.s32 256, 256
      %37 = vsyncadd [#allocation6], %s36
      %s39 = sshll.u32 [#allocation5], 4
      %s40 = int_to_ptr.vmem [resolvable:$true] %s39
      %42 = dma.hbm_to_vmem [thread:$0]  %s5, 256, %s40, [#allocation6]
    $region25: #{tpu_custom_call.1} parent=1 // pred_fallthru
      _
    // Predicated region
    $region26: #{tpu_custom_call.1} parent=1 // pred_check
      _
    $region27: #{tpu_custom_call.1} parent=1 // pred_check_branch
      %44 = sbr.rel (0) target = $region29
    $region28: #{tpu_custom_call.1} parent=1 // pred_region
      _
    $region29: #{tpu_custom_call.1} parent=1 // pred_fallthru
      _
    // Predicated region
    $region30: #{tpu_custom_call.1} parent=1 // pred_check
      _
    $region31: #{tpu_custom_call.1} parent=1 // pred_check_branch
      %46 = sbr.rel (0) target = $region33
    $region32: #{tpu_custom_call.1} parent=1 // pred_region
      %47 = dma.done [#allocation3], 128
    $region33: #{tpu_custom_call.1} parent=1 // pred_fallthru
      _
    // Predicated region
    $region34: #{tpu_custom_call.1} parent=1 // pred_check
      _
    $region35: #{tpu_custom_call.1} parent=1 // pred_check_branch
      %49 = sbr.rel (0) target = $region37
    $region36: #{tpu_custom_call.1} parent=1 // pred_region
      %50 = dma.done [#allocation6], 256
    $region37: #{tpu_custom_call.1} parent=1 // pred_fallthru
      _
    %v51 = vld [vmem:[%s0] sm:$0xff]
    %v52 = vld [vmem:[%s0 + $0x8] sm:$0xff]
    %v53 = vld [vmem:[%s2] sm:$0xff]
    %v54 = vld [vmem:[%s2 + $0x8] sm:$0xff]
    %v55 = vld [vmem:[%s2 + $0x10] sm:$0xff]
    %v56 = vld [vmem:[%s2 + $0x18] sm:$0xff]
    %v57 = vld [vmem:[%s2 + $0x20] sm:$0xff]
    %v58 = vld [vmem:[%s2 + $0x28] sm:$0xff]
    %v59 = vld [vmem:[%s2 + $0x30] sm:$0xff]
    %v60 = vld [vmem:[%s2 + $0x38] sm:$0xff]
    %v61 = vld [vmem:[%s2 + $0x40] sm:$0xff]
    %v62 = vld [vmem:[%s2 + $0x48] sm:$0xff]
    %v63 = vld [vmem:[%s2 + $0x50] sm:$0xff]
    %v64 = vld [vmem:[%s2 + $0x58] sm:$0xff]
    %v65 = vld [vmem:[%s2 + $0x60] sm:$0xff]
    %v66 = vld [vmem:[%s2 + $0x68] sm:$0xff]
    %v67 = vld [vmem:[%s2 + $0x70] sm:$0xff]
    %v68 = vld [vmem:[%s2 + $0x78] sm:$0xff]
    %v69 = vld [vmem:[%s2 + $0x80] sm:$0xff]
    %v70 = vld [vmem:[%s2 + $0x88] sm:$0xff]
    %v71 = vld [vmem:[%s2 + $0x90] sm:$0xff]
    %v72 = vld [vmem:[%s2 + $0x98] sm:$0xff]
    %v73 = vld [vmem:[%s2 + $0xa0] sm:$0xff]
    %v74 = vld [vmem:[%s2 + $0xa8] sm:$0xff]
    %v75 = vld [vmem:[%s2 + $0xb0] sm:$0xff]
    %v76 = vld [vmem:[%s2 + $0xb8] sm:$0xff]
    %v77 = vld [vmem:[%s2 + $0xc0] sm:$0xff]
    %v78 = vld [vmem:[%s2 + $0xc8] sm:$0xff]
    %v79 = vld [vmem:[%s2 + $0xd0] sm:$0xff]
    %v80 = vld [vmem:[%s2 + $0xd8] sm:$0xff]
    %v81 = vld [vmem:[%s2 + $0xe0] sm:$0xff]
    %v82 = vld [vmem:[%s2 + $0xe8] sm:$0xff]
    %v83 = vld [vmem:[%s2 + $0xf0] sm:$0xff]
    %v84 = vld [vmem:[%s2 + $0xf8] sm:$0xff]
    %v85 = vld [vmem:[%s2 + $0x100] sm:$0xff]
    %v86 = vld [vmem:[%s2 + $0x108] sm:$0xff]
    %v87 = vld [vmem:[%s2 + $0x110] sm:$0xff]
    %v88 = vld [vmem:[%s2 + $0x118] sm:$0xff]
    %v89 = vld [vmem:[%s2 + $0x120] sm:$0xff]
    %v90 = vld [vmem:[%s2 + $0x128] sm:$0xff]
    %v91 = vld [vmem:[%s2 + $0x130] sm:$0xff]
    %v92 = vld [vmem:[%s2 + $0x138] sm:$0xff]
    %v93 = vld [vmem:[%s2 + $0x140] sm:$0xff]
    %v94 = vld [vmem:[%s2 + $0x148] sm:$0xff]
    %v95 = vld [vmem:[%s2 + $0x150] sm:$0xff]
    %v96 = vld [vmem:[%s2 + $0x158] sm:$0xff]
    %v97 = vld [vmem:[%s2 + $0x160] sm:$0xff]
    %v98 = vld [vmem:[%s2 + $0x168] sm:$0xff]
    %v99 = vld [vmem:[%s2 + $0x170] sm:$0xff]
    %v100 = vld [vmem:[%s2 + $0x178] sm:$0xff]
    %v101 = vld [vmem:[%s2 + $0x180] sm:$0xff]
    %v102 = vld [vmem:[%s2 + $0x188] sm:$0xff]
    %v103 = vld [vmem:[%s2 + $0x190] sm:$0xff]
    %v104 = vld [vmem:[%s2 + $0x198] sm:$0xff]
    %v105 = vld [vmem:[%s2 + $0x1a0] sm:$0xff]
    %v106 = vld [vmem:[%s2 + $0x1a8] sm:$0xff]
    %v107 = vld [vmem:[%s2 + $0x1b0] sm:$0xff]
    %v108 = vld [vmem:[%s2 + $0x1b8] sm:$0xff]
    %v109 = vld [vmem:[%s2 + $0x1c0] sm:$0xff]
    %v110 = vld [vmem:[%s2 + $0x1c8] sm:$0xff]
    %v111 = vld [vmem:[%s2 + $0x1d0] sm:$0xff]
    %v112 = vld [vmem:[%s2 + $0x1d8] sm:$0xff]
    %v113 = vld [vmem:[%s2 + $0x1e0] sm:$0xff]
    %v114 = vld [vmem:[%s2 + $0x1e8] sm:$0xff]
    %v115 = vld [vmem:[%s2 + $0x1f0] sm:$0xff]
    %v116 = vld [vmem:[%s2 + $0x1f8] sm:$0xff]
    %v117 = vld [vmem:[%s3] sm:$0x3]
    %v119 = vlaneseq
    %v120 = vshrl.u32 %v119, 7
    %v121 = vsub.s32 0, %v120
    %v122 = vrot.slane %v117, %v121
    %v123 = vlaneseq
    %v124 = vshrl.u32 %v123, 7
    %v125 = vsub.s32 1, %v124
    %v126 = vrot.slane %v117, %v125
    %129 = vmatprep.subr.mxu0 %v84
    %130 = vmatpush1.msra.mxu0 %v83
    %131 = vmatprep.subr.mxu0 %v82
    %132 = vmatpush1.msra.mxu0 %v81
    %133 = vmatprep.subr.mxu0 %v80
    %134 = vmatpush1.msra.mxu0 %v79
    %135 = vmatprep.subr.mxu0 %v78
    %136 = vmatpush1.msra.mxu0 %v77
    %137 = vmatprep.subr.mxu0 %v76
    %138 = vmatpush1.msra.mxu0 %v75
    %139 = vmatprep.subr.mxu0 %v74
    %140 = vmatpush1.msra.mxu0 %v73
    %141 = vmatprep.subr.mxu0 %v72
    %142 = vmatpush1.msra.mxu0 %v71
    %143 = vmatprep.subr.mxu0 %v70
    %144 = vmatpush1.msra.mxu0 %v69
    %145 = vmatprep.subr.mxu0 %v68
    %146 = vmatpush1.msra.mxu0 %v67
    %147 = vmatprep.subr.mxu0 %v66
    %148 = vmatpush1.msra.mxu0 %v65
    %149 = vmatprep.subr.mxu0 %v64
    %150 = vmatpush1.msra.mxu0 %v63
    %151 = vmatprep.subr.mxu0 %v62
    %152 = vmatpush1.msra.mxu0 %v61
    %153 = vmatprep.subr.mxu0 %v60
    %154 = vmatpush1.msra.mxu0 %v59
    %155 = vmatprep.subr.mxu0 %v58
    %156 = vmatpush1.msra.mxu0 %v57
    %157 = vmatprep.subr.mxu0 %v56
    %158 = vmatpush1.msra.mxu0 %v55
    %159 = vmatprep.subr.mxu0 %v54
    %160 = vmatpush1.msra.mxu0 %v53
    %161 = vmatprep.subr.mxu0 %v116
    %162 = vmatpush2.msra.mxu0 %v115
    %163 = vmatprep.subr.mxu0 %v114
    %164 = vmatpush2.msra.mxu0 %v113
    %165 = vmatprep.subr.mxu0 %v112
    %166 = vmatpush2.msra.mxu0 %v111
    %167 = vmatprep.subr.mxu0 %v110
    %168 = vmatpush2.msra.mxu0 %v109
    %169 = vmatprep.subr.mxu0 %v108
    %170 = vmatpush2.msra.mxu0 %v107
    %171 = vmatprep.subr.mxu0 %v106
    %172 = vmatpush2.msra.mxu0 %v105
    %173 = vmatprep.subr.mxu0 %v104
    %174 = vmatpush2.msra.mxu0 %v103
    %175 = vmatprep.subr.mxu0 %v102
    %176 = vmatpush2.msra.mxu0 %v101
    %177 = vmatprep.subr.mxu0 %v100
    %178 = vmatpush2.msra.mxu0 %v99
    %179 = vmatprep.subr.mxu0 %v98
    %180 = vmatpush2.msra.mxu0 %v97
    %181 = vmatprep.subr.mxu0 %v96
    %182 = vmatpush2.msra.mxu0 %v95
    %183 = vmatprep.subr.mxu0 %v94
    %184 = vmatpush2.msra.mxu0 %v93
    %185 = vmatprep.subr.mxu0 %v92
    %186 = vmatpush2.msra.mxu0 %v91
    %187 = vmatprep.subr.mxu0 %v90
    %188 = vmatpush2.msra.mxu0 %v89
    %189 = vmatprep.subr.mxu0 %v88
    %190 = vmatpush2.msra.mxu0 %v87
    %191 = vmatprep.subr.mxu0 %v86
    %192 = vmatpush2.msra.mxu0 %v85
    %193 = vmatprep.mubr.f32.mxu0 %v52
    %194 = vmatmul.mubr.f32.gmra.mxu0 %v51
    %v195 = vpop.f32.mrf.mxu0
    %v196 = vadd.f32 %v122, %v195
    %v197 = vpop.f32.mrf.mxu0
    %v198 = vadd.f32 %v126, %v197
    %199 = vdwg.mxu0
    %v200 = vtanh.pop %v196
    %v201 = vtanh.pop %v198
    %v202 = vld [vmem:[%s4] sm:$0xff]
    %v203 = vld [vmem:[%s4 + $0x8] sm:$0xff]
    %v204 = vld [vmem:[%s4 + $0x10] sm:$0xff]
    %v205 = vld [vmem:[%s4 + $0x18] sm:$0xff]
    %v206 = vld [vmem:[%s4 + $0x20] sm:$0xff]
    %v207 = vld [vmem:[%s4 + $0x28] sm:$0xff]
    %v208 = vld [vmem:[%s4 + $0x30] sm:$0xff]
    %v209 = vld [vmem:[%s4 + $0x38] sm:$0xff]
    %v210 = vld [vmem:[%s4 + $0x40] sm:$0xff]
    %v211 = vld [vmem:[%s4 + $0x48] sm:$0xff]
    %v212 = vld [vmem:[%s4 + $0x50] sm:$0xff]
    %v213 = vld [vmem:[%s4 + $0x58] sm:$0xff]
    %v214 = vld [vmem:[%s4 + $0x60] sm:$0xff]
    %v215 = vld [vmem:[%s4 + $0x68] sm:$0xff]
    %v216 = vld [vmem:[%s4 + $0x70] sm:$0xff]
    %v217 = vld [vmem:[%s4 + $0x78] sm:$0xff]
    %v218 = vld [vmem:[%s4 + $0x80] sm:$0xff]
    %v219 = vld [vmem:[%s4 + $0x88] sm:$0xff]
    %v220 = vld [vmem:[%s4 + $0x90] sm:$0xff]
    %v221 = vld [vmem:[%s4 + $0x98] sm:$0xff]
    %v222 = vld [vmem:[%s4 + $0xa0] sm:$0xff]
    %v223 = vld [vmem:[%s4 + $0xa8] sm:$0xff]
    %v224 = vld [vmem:[%s4 + $0xb0] sm:$0xff]
    %v225 = vld [vmem:[%s4 + $0xb8] sm:$0xff]
    %v226 = vld [vmem:[%s4 + $0xc0] sm:$0xff]
    %v227 = vld [vmem:[%s4 + $0xc8] sm:$0xff]
    %v228 = vld [vmem:[%s4 + $0xd0] sm:$0xff]
    %v229 = vld [vmem:[%s4 + $0xd8] sm:$0xff]
    %v230 = vld [vmem:[%s4 + $0xe0] sm:$0xff]
    %v231 = vld [vmem:[%s4 + $0xe8] sm:$0xff]
    %v232 = vld [vmem:[%s4 + $0xf0] sm:$0xff]
    %v233 = vld [vmem:[%s4 + $0xf8] sm:$0xff]
    %v234 = vld [vmem:[#allocation2] sm:$0xff]
    %235 = vmatprep.subr.mxu0 0.0
    %236 = vmatpush1.msra.mxu0 %v217
    %237 = vmatprep.subr.mxu0 0.0
    %238 = vmatpush1.msra.mxu0 %v216
    %239 = vmatprep.subr.mxu0 0.0
    %240 = vmatpush1.msra.mxu0 %v215
    %241 = vmatprep.subr.mxu0 0.0
    %242 = vmatpush1.msra.mxu0 %v214
    %243 = vmatprep.subr.mxu0 0.0
    %244 = vmatpush1.msra.mxu0 %v213
    %245 = vmatprep.subr.mxu0 0.0
    %246 = vmatpush1.msra.mxu0 %v212
    %247 = vmatprep.subr.mxu0 0.0
    %248 = vmatpush1.msra.mxu0 %v211
    %249 = vmatprep.subr.mxu0 0.0
    %250 = vmatpush1.msra.mxu0 %v210
    %251 = vmatprep.subr.mxu0 0.0
    %252 = vmatpush1.msra.mxu0 %v209
    %253 = vmatprep.subr.mxu0 0.0
    %254 = vmatpush1.msra.mxu0 %v208
    %255 = vmatprep.subr.mxu0 0.0
    %256 = vmatpush1.msra.mxu0 %v207
    %257 = vmatprep.subr.mxu0 0.0
    %258 = vmatpush1.msra.mxu0 %v206
    %259 = vmatprep.subr.mxu0 0.0
    %260 = vmatpush1.msra.mxu0 %v205
    %261 = vmatprep.subr.mxu0 0.0
    %262 = vmatpush1.msra.mxu0 %v204
    %263 = vmatprep.subr.mxu0 0.0
    %264 = vmatpush1.msra.mxu0 %v203
    %265 = vmatprep.subr.mxu0 0.0
    %266 = vmatpush1.msra.mxu0 %v202
    %267 = vmatprep.subr.mxu0 0.0
    %268 = vmatpush2.msra.mxu0 %v233
    %269 = vmatprep.subr.mxu0 0.0
    %270 = vmatpush2.msra.mxu0 %v232
    %271 = vmatprep.subr.mxu0 0.0
    %272 = vmatpush2.msra.mxu0 %v231
    %273 = vmatprep.subr.mxu0 0.0
    %274 = vmatpush2.msra.mxu0 %v230
    %275 = vmatprep.subr.mxu0 0.0
    %276 = vmatpush2.msra.mxu0 %v229
    %277 = vmatprep.subr.mxu0 0.0
    %278 = vmatpush2.msra.mxu0 %v228
    %279 = vmatprep.subr.mxu0 0.0
    %280 = vmatpush2.msra.mxu0 %v227
    %281 = vmatprep.subr.mxu0 0.0
    %282 = vmatpush2.msra.mxu0 %v226
    %283 = vmatprep.subr.mxu0 0.0
    %284 = vmatpush2.msra.mxu0 %v225
    %285 = vmatprep.subr.mxu0 0.0
    %286 = vmatpush2.msra.mxu0 %v224
    %287 = vmatprep.subr.mxu0 0.0
    %288 = vmatpush2.msra.mxu0 %v223
    %289 = vmatprep.subr.mxu0 0.0
    %290 = vmatpush2.msra.mxu0 %v222
    %291 = vmatprep.subr.mxu0 0.0
    %292 = vmatpush2.msra.mxu0 %v221
    %293 = vmatprep.subr.mxu0 0.0
    %294 = vmatpush2.msra.mxu0 %v220
    %295 = vmatprep.subr.mxu0 0.0
    %296 = vmatpush2.msra.mxu0 %v219
    %297 = vmatprep.subr.mxu0 0.0
    %298 = vmatpush2.msra.mxu0 %v218
    %299 = vmatprep.mubr.f32.mxu0 %v201
    %300 = vmatmul.mubr.f32.gmra.mxu0 %v200
    %v301 = vpop.f32.mrf.mxu0
    %v302 = vadd.f32 %v234, %v301
    %v303 = vpop.f32.mrf.mxu0
    %304 = vdwg.mxu0
    %vm305 = vcmask 64512
    %v306 = vsel %vm305, %v302, -inf
    %307 = vmax.xlane.f32.xlu0 %v306
    %v308 = vpop.xlane.xlu0 %307
    %v309 = vsub.f32 %v302, %v308
    %v310 = vmul.f32 %v309, 1.442695
    %v311 = vpow.pop %v310
    %v312 = vsel %vm305, %v311, 0.0
    %313 = vadd.xlane.f32.xlu0 %v312
    %v314 = vpop.xlane.xlu0 %313
    %v315 = vrcp.pop %v314
    %v316 = vmul.f32 %v311, %v315
    %v317 = vld [vmem:[#allocation5] sm:$0xff]
    %v318 = vld [vmem:[#allocation5 + $0x8] sm:$0xff]
    %v320 = vsel %vm305, %v316, 0
    %322 = vmatprep.subr.mxu0 0.0
    %323 = vmatpush1.msra.mxu0 0.0
    %324 = vmatprep.subr.mxu0 0.0
    %325 = vmatpush1.msra.mxu0 0.0
    %326 = vmatprep.subr.mxu0 0.0
    %327 = vmatpush1.msra.mxu0 0.0
    %328 = vmatprep.subr.mxu0 0.0
    %329 = vmatpush1.msra.mxu0 0.0
    %330 = vmatprep.subr.mxu0 0.0
    %331 = vmatpush1.msra.mxu0 0.0
    %332 = vmatprep.subr.mxu0 0.0
    %333 = vmatpush1.msra.mxu0 0.0
    %334 = vmatprep.subr.mxu0 0.0
    %335 = vmatpush1.msra.mxu0 0.0
    %336 = vmatprep.subr.mxu0 0.0
    %337 = vmatpush1.msra.mxu0 0.0
    %338 = vmatprep.subr.mxu0 0.0
    %339 = vmatpush1.msra.mxu0 0.0
    %340 = vmatprep.subr.mxu0 0.0
    %341 = vmatpush1.msra.mxu0 0.0
    %342 = vmatprep.subr.mxu0 0.0
    %343 = vmatpush1.msra.mxu0 0.0
    %344 = vmatprep.subr.mxu0 0.0
    %345 = vmatpush1.msra.mxu0 0.0
    %346 = vmatprep.subr.mxu0 0.0
    %347 = vmatpush1.msra.mxu0 0.0
    %348 = vmatprep.subr.mxu0 0.0
    %349 = vmatpush1.msra.mxu0 0.0
    %350 = vmatprep.subr.mxu0 0.0
    %351 = vmatpush1.msra.mxu0 0.0
    %352 = vmatprep.subr.mxu0 %v318
    %353 = vmatpush1.msra.mxu0 %v317
    %354 = vmatprep.subr.mxu0 0.0
    %355 = vmatpush2.msra.mxu0 0.0
    %356 = vmatprep.subr.mxu0 0.0
    %357 = vmatpush2.msra.mxu0 0.0
    %358 = vmatprep.subr.mxu0 0.0
    %359 = vmatpush2.msra.mxu0 0.0
    %360 = vmatprep.subr.mxu0 0.0
    %361 = vmatpush2.msra.mxu0 0.0
    %362 = vmatprep.subr.mxu0 0.0
    %363 = vmatpush2.msra.mxu0 0.0
    %364 = vmatprep.subr.mxu0 0.0
    %365 = vmatpush2.msra.mxu0 0.0
    %366 = vmatprep.subr.mxu0 0.0
    %367 = vmatpush2.msra.mxu0 0.0
    %368 = vmatprep.subr.mxu0 0.0
    %369 = vmatpush2.msra.mxu0 0.0
    %370 = vmatprep.subr.mxu0 0.0
    %371 = vmatpush2.msra.mxu0 0.0
    %372 = vmatprep.subr.mxu0 0.0
    %373 = vmatpush2.msra.mxu0 0.0
    %374 = vmatprep.subr.mxu0 0.0
    %375 = vmatpush2.msra.mxu0 0.0
    %376 = vmatprep.subr.mxu0 0.0
    %377 = vmatpush2.msra.mxu0 0.0
    %378 = vmatprep.subr.mxu0 0.0
    %379 = vmatpush2.msra.mxu0 0.0
    %380 = vmatprep.subr.mxu0 0.0
    %381 = vmatpush2.msra.mxu0 0.0
    %382 = vmatprep.subr.mxu0 0.0
    %383 = vmatpush2.msra.mxu0 0.0
    %384 = vmatprep.subr.mxu0 0.0
    %385 = vmatpush2.msra.mxu0 0.0
    %386 = vmatprep.mubr.f32.mxu0 0.0
    %387 = vmatmul.mubr.f32.gmra.mxu0 %v320
    %v388 = vpop.f32.mrf.mxu0
    %v389 = vadd.f32 0.0, %v388
    %v390 = vpop.f32.mrf.mxu0
    %v391 = vadd.f32 0.0, %v390
    %392 = vdwg.mxu0
    %v393 = vmul.f32 %v51, %v389
    %v394 = vmul.f32 %v52, %v391
    %v395 = vld [vmem:[%s6] sm:$0xff]
    %v396 = vld [vmem:[%s6 + $0x8] sm:$0xff]
    %v397 = vld [vmem:[%s6 + $0x10] sm:$0xff]
    %v398 = vld [vmem:[%s6 + $0x18] sm:$0xff]
    %v399 = vld [vmem:[%s6 + $0x20] sm:$0xff]
    %v400 = vld [vmem:[%s6 + $0x28] sm:$0xff]
    %v401 = vld [vmem:[%s6 + $0x30] sm:$0xff]
    %v402 = vld [vmem:[%s6 + $0x38] sm:$0xff]
    %v403 = vld [vmem:[%s6 + $0x40] sm:$0xff]
    %v404 = vld [vmem:[%s6 + $0x48] sm:$0xff]
    %v405 = vld [vmem:[%s6 + $0x50] sm:$0xff]
    %v406 = vld [vmem:[%s6 + $0x58] sm:$0xff]
    %v407 = vld [vmem:[%s6 + $0x60] sm:$0xff]
    %v408 = vld [vmem:[%s6 + $0x68] sm:$0xff]
    %v409 = vld [vmem:[%s6 + $0x70] sm:$0xff]
    %v410 = vld [vmem:[%s6 + $0x78] sm:$0xff]
    %v411 = vld [vmem:[%s6 + $0x80] sm:$0xff]
    %v412 = vld [vmem:[%s6 + $0x88] sm:$0xff]
    %v413 = vld [vmem:[%s6 + $0x90] sm:$0xff]
    %v414 = vld [vmem:[%s6 + $0x98] sm:$0xff]
    %v415 = vld [vmem:[%s6 + $0xa0] sm:$0xff]
    %v416 = vld [vmem:[%s6 + $0xa8] sm:$0xff]
    %v417 = vld [vmem:[%s6 + $0xb0] sm:$0xff]
    %v418 = vld [vmem:[%s6 + $0xb8] sm:$0xff]
    %v419 = vld [vmem:[%s6 + $0xc0] sm:$0xff]
    %v420 = vld [vmem:[%s6 + $0xc8] sm:$0xff]
    %v421 = vld [vmem:[%s6 + $0xd0] sm:$0xff]
    %v422 = vld [vmem:[%s6 + $0xd8] sm:$0xff]
    %v423 = vld [vmem:[%s6 + $0xe0] sm:$0xff]
    %v424 = vld [vmem:[%s6 + $0xe8] sm:$0xff]
    %v425 = vld [vmem:[%s6 + $0xf0] sm:$0xff]
    %v426 = vld [vmem:[%s6 + $0xf8] sm:$0xff]
    %427 = vmatprep.subr.mxu0 0.0
    %428 = vmatpush1.msra.mxu0 %v410
    %429 = vmatprep.subr.mxu0 0.0
    %430 = vmatpush1.msra.mxu0 %v409
    %431 = vmatprep.subr.mxu0 0.0
    %432 = vmatpush1.msra.mxu0 %v408
    %433 = vmatprep.subr.mxu0 0.0
    %434 = vmatpush1.msra.mxu0 %v407
    %435 = vmatprep.subr.mxu0 0.0
    %436 = vmatpush1.msra.mxu0 %v406
    %437 = vmatprep.subr.mxu0 0.0
    %438 = vmatpush1.msra.mxu0 %v405
    %439 = vmatprep.subr.mxu0 0.0
    %440 = vmatpush1.msra.mxu0 %v404
    %441 = vmatprep.subr.mxu0 0.0
    %442 = vmatpush1.msra.mxu0 %v403
    %443 = vmatprep.subr.mxu0 0.0
    %444 = vmatpush1.msra.mxu0 %v402
    %445 = vmatprep.subr.mxu0 0.0
    %446 = vmatpush1.msra.mxu0 %v401
    %447 = vmatprep.subr.mxu0 0.0
    %448 = vmatpush1.msra.mxu0 %v400
    %449 = vmatprep.subr.mxu0 0.0
    %450 = vmatpush1.msra.mxu0 %v399
    %451 = vmatprep.subr.mxu0 0.0
    %452 = vmatpush1.msra.mxu0 %v398
    %453 = vmatprep.subr.mxu0 0.0
    %454 = vmatpush1.msra.mxu0 %v397
    %455 = vmatprep.subr.mxu0 0.0
    %456 = vmatpush1.msra.mxu0 %v396
    %457 = vmatprep.subr.mxu0 0.0
    %458 = vmatpush1.msra.mxu0 %v395
    %459 = vmatprep.subr.mxu0 0.0
    %460 = vmatpush2.msra.mxu0 %v426
    %461 = vmatprep.subr.mxu0 0.0
    %462 = vmatpush2.msra.mxu0 %v425
    %463 = vmatprep.subr.mxu0 0.0
    %464 = vmatpush2.msra.mxu0 %v424
    %465 = vmatprep.subr.mxu0 0.0
    %466 = vmatpush2.msra.mxu0 %v423
    %467 = vmatprep.subr.mxu0 0.0
    %468 = vmatpush2.msra.mxu0 %v422
    %469 = vmatprep.subr.mxu0 0.0
    %470 = vmatpush2.msra.mxu0 %v421
    %471 = vmatprep.subr.mxu0 0.0
    %472 = vmatpush2.msra.mxu0 %v420
    %473 = vmatprep.subr.mxu0 0.0
    %474 = vmatpush2.msra.mxu0 %v419
    %475 = vmatprep.subr.mxu0 0.0
    %476 = vmatpush2.msra.mxu0 %v418
    %477 = vmatprep.subr.mxu0 0.0
    %478 = vmatpush2.msra.mxu0 %v417
    %479 = vmatprep.subr.mxu0 0.0
    %480 = vmatpush2.msra.mxu0 %v416
    %481 = vmatprep.subr.mxu0 0.0
    %482 = vmatpush2.msra.mxu0 %v415
    %483 = vmatprep.subr.mxu0 0.0
    %484 = vmatpush2.msra.mxu0 %v414
    %485 = vmatprep.subr.mxu0 0.0
    %486 = vmatpush2.msra.mxu0 %v413
    %487 = vmatprep.subr.mxu0 0.0
    %488 = vmatpush2.msra.mxu0 %v412
    %489 = vmatprep.subr.mxu0 0.0
    %490 = vmatpush2.msra.mxu0 %v411
    %491 = vmatprep.mubr.f32.mxu0 %v394
    %492 = vmatmul.mubr.f32.gmra.mxu0 %v393
    %v493 = vpop.f32.mrf.mxu0
    %v494 = vadd.f32 0.0, %v493
    %v495 = vpop.f32.mrf.mxu0
    %496 = vdwg.mxu0
    %vm497 = vcmask 261120
    %498 = vst.msk [vmem:[#allocation7] sm:$0xff] %vm497, %v494
    // Predicated region
    $region38: #{tpu_custom_call.1} parent=1 // pred_check
      _
    $region39: #{tpu_custom_call.1} parent=1 // pred_check_branch
      %500 = sbr.rel (0) target = $region41
    $region40: #{tpu_custom_call.1} parent=1 // pred_region
      %s502 = ssub.s32 128, 128
      %503 = vsyncadd [#allocation4], %s502
      %s505 = sshll.u32 [#allocation7], 4
      %s506 = int_to_ptr.vmem [resolvable:$true] %s505
      %508 = dma.vmem_to_hbm [thread:$0]  %s506, 128, %s7, [#allocation4]
    $region41: #{tpu_custom_call.1} parent=1 // pred_fallthru
      _
    // Predicated region
    $region42: #{tpu_custom_call.1} parent=1 // pred_check
      _
    $region43: #{tpu_custom_call.1} parent=1 // pred_check_branch
      %510 = sbr.rel (0) target = $region45
    $region44: #{tpu_custom_call.1} parent=1 // pred_region
      %511 = dma.done [#allocation4], 128
    $region45: #{tpu_custom_call.1} parent=1 // pred_fallthru
      _
    %512 = vsyncpa [#allocation3], 1
    %513 = vsyncpa [#allocation6], 1
    %514 = vsyncpa [#allocation4], 1

</llo_original>
